<compile_context>
chip_gen: v7x
topology: tpu7x:2x2x1
jax: 0.10.0
libtpu: 0.0.40
codegen_flags: <defaults>
</compile_context>

<pallas_src>
import functools
import math

import jax
import jax.numpy as jnp
from jax.experimental import pallas as pl
from jax.experimental.pallas import tpu as pltpu

HP = jax.lax.Precision.HIGHEST  # for the pure-JAX reference only


# ----------------------------------------------------------------------------
# helpers
# ----------------------------------------------------------------------------
def _pick_tile(dim, prefs):
    """Largest preferred tile that evenly divides `dim`, else the full dim."""
    for p in prefs:
        if p <= dim and dim % p == 0:
            return p
    return dim


def _pad_to_128(n):
    return ((n + 127) // 128) * 128


# ----------------------------------------------------------------------------
# Pallas kernels
# ----------------------------------------------------------------------------
def _linear_tiled_kernel(x_ref, w_ref, b_ref, o_ref, acc_ref, *, relu):
    k = pl.program_id(2)

    @pl.when(k == 0)
    def _():
        acc_ref[...] = jnp.zeros_like(acc_ref)

    acc_ref[...] += jnp.dot(
        x_ref[...], w_ref[...], preferred_element_type=jnp.float32
    )

    @pl.when(k == pl.num_programs(2) - 1)
    def _():
        y = acc_ref[...] + b_ref[...]
        if relu:
            y = jnp.maximum(y, 0.0)
        o_ref[...] = y


def _attention_kernel(q_ref, k_ref, v_ref, bias_ref, o_ref):
    # blocks: q (1,1,Sq,D)  k,v (1,1,Sk,D)  bias (1,Sq,Sk) additive (0 / -1e20)
    q = q_ref[0, 0]                      # (Sq, D), already scaled by 1/sqrt(E)
    k = k_ref[0, 0]                      # (Sk, D)
    v = v_ref[0, 0]                      # (Sk, D)
    bias = bias_ref[0]                   # (Sq, Sk)
    # contract last dims of both operands -> no transpose/relayout of K
    s = jax.lax.dot_general(
        q, k, (((1,), (1,)), ((), ())), preferred_element_type=jnp.float32
    )                                    # (Sq, Sk)
    s = s + bias
    s = s - jnp.max(s, axis=-1, keepdims=True)
    p = jnp.exp(s)
    denom = jnp.sum(p, axis=-1, keepdims=True)
    p = p * pl.reciprocal(denom, approx=True)        # EUP, effectively free
    o_ref[0, 0] = jnp.dot(p, v, preferred_element_type=jnp.float32)


def _add_layernorm_kernel(x_ref, r_ref, g_ref, b_ref, o_ref):
    x = x_ref[...] + r_ref[...]
    mean = jnp.mean(x, axis=-1, keepdims=True)
    var = jnp.mean((x - mean) ** 2, axis=-1, keepdims=True)
    o_ref[...] = (x - mean) * jax.lax.rsqrt(var + 1e-5) * g_ref[...] + b_ref[...]


def _ln_ffn_ln_kernel(a_ref, r_ref, g1_ref, b1_ref, w1_ref, c1_ref,
                      w2_ref, c2_ref, g2_ref, b2_ref, o_ref):
    # x = LN(attn + residual); h = relu(x@W1+b1); y = h@W2+b2; out = LN(y + x)
    x = a_ref[...] + r_ref[...]
    mean = jnp.mean(x, axis=-1, keepdims=True)
    var = jnp.mean((x - mean) ** 2, axis=-1, keepdims=True)
    x = (x - mean) * jax.lax.rsqrt(var + 1e-5) * g1_ref[...] + b1_ref[...]

    h = jnp.dot(x, w1_ref[...], preferred_element_type=jnp.float32) + c1_ref[...]
    h = jnp.maximum(h, 0.0)
    y = jnp.dot(h, w2_ref[...], preferred_element_type=jnp.float32) + c2_ref[...]

    y = y + x
    mean = jnp.mean(y, axis=-1, keepdims=True)
    var = jnp.mean((y - mean) ** 2, axis=-1, keepdims=True)
    o_ref[...] = (y - mean) * jax.lax.rsqrt(var + 1e-5) * g2_ref[...] + b2_ref[...]


# ----------------------------------------------------------------------------
# Pallas op wrappers
# ----------------------------------------------------------------------------
def linear_pallas(x, w, b=None, relu=False):
    """y = x @ w (+ b) (+ relu); tiled, pipelined, lane-dense (N padded to 128)."""
    M, K = x.shape
    N = w.shape[1]
    Np = _pad_to_128(N)
    if Np != N:
        w = jnp.pad(w, ((0, 0), (0, Np - N)))
        if b is not None:
            b = jnp.pad(b, (0, Np - N))
    if b is None:
        b = jnp.zeros((Np,), jnp.float32)

    tm = _pick_tile(M, (512, 256, 128, 64, 32, 16, 8))
    tn = _pick_tile(Np, (512, 256, 128))
    tk = _pick_tile(K, (512, 256, 128))
    grid = (M // tm, Np // tn, K // tk)

    out = pl.pallas_call(
        functools.partial(_linear_tiled_kernel, relu=relu),
        out_shape=jax.ShapeDtypeStruct((M, Np), jnp.float32),
        grid=grid,
        in_specs=[
            pl.BlockSpec((tm, tk), lambda i, j, k: (i, k)),
            pl.BlockSpec((tk, tn), lambda i, j, k: (k, j)),
            pl.BlockSpec((1, tn), lambda i, j, k: (0, j)),
        ],
        out_specs=pl.BlockSpec((tm, tn), lambda i, j, k: (i, j)),
        scratch_shapes=[pltpu.VMEM((tm, tn), jnp.float32)],
        compiler_params=pltpu.CompilerParams(
            dimension_semantics=("parallel", "parallel", "arbitrary")
        ),
    )(x, w, b.reshape(1, Np))
    return out[:, :N] if Np != N else out


def attention_pallas(q, k, v, bias):
    # q: (B,H,Sq,D) pre-scaled; k,v: (B,H,Sk,D); bias: (B,Sq,Sk) additive mask
    B, H, Sq, D = q.shape
    Sk = k.shape[2]
    return pl.pallas_call(
        _attention_kernel,
        out_shape=jax.ShapeDtypeStruct((B, H, Sq, D), jnp.float32),
        grid=(B, H),
        in_specs=[
            pl.BlockSpec((1, 1, Sq, D), lambda b, h: (b, h, 0, 0)),
            pl.BlockSpec((1, 1, Sk, D), lambda b, h: (b, h, 0, 0)),
            pl.BlockSpec((1, 1, Sk, D), lambda b, h: (b, h, 0, 0)),
            pl.BlockSpec((1, Sq, Sk), lambda b, h: (b, 0, 0)),
        ],
        out_specs=pl.BlockSpec((1, 1, Sq, D), lambda b, h: (b, h, 0, 0)),
        compiler_params=pltpu.CompilerParams(
            dimension_semantics=("parallel", "parallel")
        ),
    )(q, k, v, bias)


def add_layernorm_pallas(x, res, gamma, beta):
    M, E = x.shape
    tm = _pick_tile(M, (512, 256, 128, 64, 32, 16, 8))
    return pl.pallas_call(
        _add_layernorm_kernel,
        out_shape=jax.ShapeDtypeStruct((M, E), jnp.float32),
        grid=(M // tm,),
        in_specs=[
            pl.BlockSpec((tm, E), lambda i: (i, 0)),
            pl.BlockSpec((tm, E), lambda i: (i, 0)),
            pl.BlockSpec((1, E), lambda i: (0, 0)),
            pl.BlockSpec((1, E), lambda i: (0, 0)),
        ],
        out_specs=pl.BlockSpec((tm, E), lambda i: (i, 0)),
        compiler_params=pltpu.CompilerParams(dimension_semantics=("parallel",)),
    )(x, res, gamma.reshape(1, E), beta.reshape(1, E))


def ln_ffn_ln_pallas(attn, res, p):
    # Fused LN1(attn+res) -> FFN1(ReLU) -> FFN2 -> LN2(+residual) per M-tile.
    M, E = attn.shape
    F = p["ff1_w"].shape[1]
    tm = _pick_tile(M, (256, 128, 64, 32, 16, 8))
    return pl.pallas_call(
        _ln_ffn_ln_kernel,
        out_shape=jax.ShapeDtypeStruct((M, E), jnp.float32),
        grid=(M // tm,),
        in_specs=[
            pl.BlockSpec((tm, E), lambda i: (i, 0)),   # attn
            pl.BlockSpec((tm, E), lambda i: (i, 0)),   # residual (query)
            pl.BlockSpec((1, E), lambda i: (0, 0)),    # ln1 gamma
            pl.BlockSpec((1, E), lambda i: (0, 0)),    # ln1 beta
            pl.BlockSpec((E, F), lambda i: (0, 0)),    # ff1 w
            pl.BlockSpec((1, F), lambda i: (0, 0)),    # ff1 b
            pl.BlockSpec((F, E), lambda i: (0, 0)),    # ff2 w
            pl.BlockSpec((1, E), lambda i: (0, 0)),    # ff2 b
            pl.BlockSpec((1, E), lambda i: (0, 0)),    # ln2 gamma
            pl.BlockSpec((1, E), lambda i: (0, 0)),    # ln2 beta
        ],
        out_specs=pl.BlockSpec((tm, E), lambda i: (i, 0)),
        compiler_params=pltpu.CompilerParams(dimension_semantics=("parallel",)),
    )(attn, res,
      p["ln1_g"].reshape(1, E), p["ln1_b"].reshape(1, E),
      p["ff1_w"], p["ff1_b"].reshape(1, F),
      p["ff2_w"], p["ff2_b"].reshape(1, E),
      p["ln2_g"].reshape(1, E), p["ln2_b"].reshape(1, E))


PALLAS_OPS = {
    "linear": linear_pallas,
    "attention": attention_pallas,
    "add_layernorm": add_layernorm_pallas,
    "ln_ffn_ln": ln_ffn_ln_pallas,
}


# ----------------------------------------------------------------------------
# Pure-JAX reference ops (same math, used for correctness check)
# ----------------------------------------------------------------------------
def _ref_linear(x, w, b=None, relu=False):
    y = jnp.dot(x, w, precision=HP)
    if b is not None:
        y = y + b[None]
    return jnp.maximum(y, 0.0) if relu else y


def _ref_attention(q, k, v, bias):
    s = jnp.einsum("bhqd,bhkd->bhqk", q, k, precision=HP) + bias[:, None]
    p = jax.nn.softmax(s, axis=-1)
    return jnp.einsum("bhqk,bhkd->bhqd", p, v, precision=HP)


def _ref_ln(x, g, b):
    mean = x.mean(-1, keepdims=True)
    var = ((x - mean) ** 2).mean(-1, keepdims=True)
    return (x - mean) / jnp.sqrt(var + 1e-5) * g[None] + b[None]


def _ref_add_layernorm(x, res, g, b):
    return _ref_ln(x + res, g, b)


def _ref_ln_ffn_ln(attn, res, p):
    x = _ref_ln(attn + res, p["ln1_g"], p["ln1_b"])
    h = jnp.maximum(jnp.dot(x, p["ff1_w"], precision=HP) + p["ff1_b"][None], 0.0)
    y = jnp.dot(h, p["ff2_w"], precision=HP) + p["ff2_b"][None]
    return _ref_ln(y + x, p["ln2_g"], p["ln2_b"])


REF_OPS = {
    "linear": _ref_linear,
    "attention": _ref_attention,
    "add_layernorm": _ref_add_layernorm,
    "ln_ffn_ln": _ref_ln_ffn_ln,
}


# ----------------------------------------------------------------------------
# Transformer forward (structure mirrors the PyTorch module, dropout p=0)
# ----------------------------------------------------------------------------
def self_attention_fwd(ops, p, values, keys, query, add_mask, embed_size, heads):
    B, Lv, E = values.shape
    Lk, Lq = keys.shape[1], query.shape[1]
    H = heads
    D = E // H
    scale = 1.0 / math.sqrt(embed_size)

    # Per-head Linear(D, D, bias=False) shared across heads == block-diagonal
    # (E, E) weight on the packed embedding. Fold the softmax scale into Wq.
    eye = jnp.eye(H, dtype=jnp.float32)
    wq_bd = jnp.kron(eye, p["wq"]) * scale
    wk_bd = jnp.kron(eye, p["wk"])
    wv_bd = jnp.kron(eye, p["wv"])

    if query is keys and keys is values:
        # Fully fused QKV projection: one [B*L, E] @ [E, 3E] matmul.
        w_qkv = jnp.concatenate([wq_bd, wk_bd, wv_bd], axis=1)
        qkv = ops["linear"](query.reshape(B * Lq, E), w_qkv)
        q2, k2, v2 = qkv[:, :E], qkv[:, E:2 * E], qkv[:, 2 * E:]
        Lkv = Lq
    else:
        q2 = ops["linear"](query.reshape(B * Lq, E), wq_bd)
        if keys is values:
            w_kv = jnp.concatenate([wk_bd, wv_bd], axis=1)
            kv = ops["linear"](keys.reshape(B * Lk, E), w_kv)
            k2, v2 = kv[:, :E], kv[:, E:]
        else:
            k2 = ops["linear"](keys.reshape(B * Lk, E), wk_bd)
            v2 = ops["linear"](values.reshape(B * Lv, E), wv_bd)
        Lkv = Lk

    q = q2.reshape(B, Lq, H, D).transpose(0, 2, 1, 3)
    k = k2.reshape(B, Lkv, H, D).transpose(0, 2, 1, 3)
    v = v2.reshape(B, Lkv, H, D).transpose(0, 2, 1, 3)

    o = ops["attention"](q, k, v, add_mask)                 # (B, H, Lq, D)
    o = o.transpose(0, 2, 1, 3).reshape(B * Lq, E)
    # TODO(synk): fuse the Wo projection into the attention epilogue to remove
    #             this transpose/reshape HBM round-trip.
    return ops["linear"](o, p["wo"], p["bo"]).reshape(B, Lq, E)


def transformer_block_fwd(ops, p, value, key, query, add_mask, embed_size, heads):
    B, Lq, E = query.shape
    attn = self_attention_fwd(ops, p["attn"], value, key, query, add_mask,
                              embed_size, heads)
    out = ops["ln_ffn_ln"](attn.reshape(B * Lq, E), query.reshape(B * Lq, E), p)
    return out.reshape(B, Lq, E)


def decoder_block_fwd(ops, p, x, value, key, src_mask, tgt_mask, embed_size, heads):
    B, T, E = x.shape
    attn = self_attention_fwd(ops, p["attn"], x, x, x, tgt_mask, embed_size, heads)
    q = ops["add_layernorm"](attn.reshape(B * T, E), x.reshape(B * T, E),
                             p["ln_g"], p["ln_b"]).reshape(B, T, E)
    return transformer_block_fwd(ops, p["tblock"], value, key, q, src_mask,
                                 embed_size, heads)


def encoder_fwd(ops, params, src, src_mask, embed_size, heads):
    B, S = src.shape
    word = params["word_emb"][src]                      # gather (glue)
    pos = params["pos_emb"][jnp.arange(S)]
    out = word + pos[None]
    for layer_p in params["layers"]:
        out = transformer_block_fwd(ops, layer_p, out, out, out, src_mask,
                                    embed_size, heads)
    return out


def decoder_fwd(ops, params, tgt, enc_out, src_mask, tgt_mask, embed_size, heads):
    B, T = tgt.shape
    word = params["word_emb"][tgt]                      # gather (glue)
    pos = params["pos_emb"][jnp.arange(T)]
    x = word + pos[None]
    for layer_p in params["layers"]:
        x = decoder_block_fwd(ops, layer_p, x, enc_out, enc_out, src_mask,
                              tgt_mask, embed_size, heads)
    E = x.shape[-1]
    return ops["linear"](x.reshape(B * T, E), params["fc_w"],
                         params["fc_b"]).reshape(B, T, -1)


def transformer_fwd(ops, params, src, tgt, src_pad_idx, embed_size, heads):
    B, S = src.shape
    T = tgt.shape[1]
    neg = jnp.float32(-1e20)
    # Additive masks (0 keep / -1e20 masked), precomputed once in JAX.
    keep = (src != src_pad_idx)                                        # (B, S)
    src_bias = jnp.where(keep[:, None, :], jnp.float32(0.0), neg)      # (B,1,S)
    src_bias_enc = jnp.broadcast_to(src_bias, (B, S, S))
    src_bias_dec = jnp.broadcast_to(src_bias, (B, T, S))
    causal = jnp.tril(jnp.ones((T, T), jnp.float32))
    tgt_bias = jnp.broadcast_to(
        jnp.where(causal[None] > 0, jnp.float32(0.0), neg), (B, T, T))
    enc_out = encoder_fwd(ops, params["encoder"], src, src_bias_enc,
                          embed_size, heads)
    return decoder_fwd(ops, params["decoder"], tgt, enc_out, src_bias_dec,
                       tgt_bias, embed_size, heads)


# ----------------------------------------------------------------------------
# Deterministic parameter init
# ----------------------------------------------------------------------------
class KeyGen:
    def __init__(self, seed):
        self.key = jax.random.PRNGKey(seed)

    def __call__(self):
        self.key, sub = jax.random.split(self.key)
        return sub


def init_attention_params(kg, E, H):
    D = E // H
    s = 0.05
    return {
        "wv": s * jax.random.normal(kg(), (D, D), jnp.float32),
        "wk": s * jax.random.normal(kg(), (D, D), jnp.float32),
        "wq": s * jax.random.normal(kg(), (D, D), jnp.float32),
        "wo": s * jax.random.normal(kg(), (E, E), jnp.float32),
        "bo": jnp.zeros((E,), jnp.float32),
    }


def init_tblock_params(kg, E, H, FX):
    F = FX * E
    return {
        "attn": init_attention_params(kg, E, H),
        "ln1_g": jnp.ones((E,), jnp.float32), "ln1_b": jnp.zeros((E,), jnp.float32),
        "ln2_g": jnp.ones((E,), jnp.float32), "ln2_b": jnp.zeros((E,), jnp.float32),
        "ff1_w": 0.05 * jax.random.normal(kg(), (E, F), jnp.float32),
        "ff1_b": jnp.zeros((F,), jnp.float32),
        "ff2_w": 0.05 * jax.random.normal(kg(), (F, E), jnp.float32),
        "ff2_b": jnp.zeros((E,), jnp.float32),
    }


def init_encoder_params(kg, V, E, H, L, FX, maxlen):
    return {
        "word_emb": 0.05 * jax.random.normal(kg(), (V, E), jnp.float32),
        "pos_emb": 0.05 * jax.random.normal(kg(), (maxlen, E), jnp.float32),
        "layers": [init_tblock_params(kg, E, H, FX) for _ in range(L)],
    }


def init_decoder_params(kg, V, E, H, L, FX, maxlen):
    return {
        "word_emb": 0.05 * jax.random.normal(kg(), (V, E), jnp.float32),
        "pos_emb": 0.05 * jax.random.normal(kg(), (maxlen, E), jnp.float32),
        "layers": [
            {
                "attn": init_attention_params(kg, E, H),
                "ln_g": jnp.ones((E,), jnp.float32),
                "ln_b": jnp.zeros((E,), jnp.float32),
                "tblock": init_tblock_params(kg, E, H, FX),
            }
            for _ in range(L)
        ],
        "fc_w": 0.05 * jax.random.normal(kg(), (E, V), jnp.float32),
        "fc_b": jnp.zeros((V,), jnp.float32),
    }


# ----------------------------------------------------------------------------
if __name__ == "__main__":
    EMBED, HEADS, LAYERS, FWD_EXP, MAXLEN = 32, 4, 2, 2, 16
    SRC_VOCAB, TGT_VOCAB = 50, 60
    B, S, T = 2, 8, 8
    SRC_PAD = 0

    kg = KeyGen(0)
    params = {
        "encoder": init_encoder_params(kg, SRC_VOCAB, EMBED, HEADS, LAYERS, FWD_EXP, MAXLEN),
        "decoder": init_decoder_params(kg, TGT_VOCAB, EMBED, HEADS, LAYERS, FWD_EXP, MAXLEN),
    }

    dkey = jax.random.PRNGKey(0)
    k1, k2 = jax.random.split(dkey)
    src = jax.random.randint(k1, (B, S), 1, SRC_VOCAB, dtype=jnp.int32)
    tgt = jax.random.randint(k2, (B, T), 1, TGT_VOCAB, dtype=jnp.int32)
    src = src.at[0, -1].set(SRC_PAD)  # exercise the padding mask

    out = transformer_fwd(PALLAS_OPS, params, src, tgt, SRC_PAD, EMBED, HEADS)
    out = jax.block_until_ready(out)

    ref = transformer_fwd(REF_OPS, params, src, tgt, SRC_PAD, EMBED, HEADS)
    assert out.shape == (B, T, TGT_VOCAB), out.shape
    assert jnp.allclose(out, ref, atol=2e-3, rtol=2e-3), float(jnp.max(jnp.abs(out - ref)))

    print("KERNEL_OK")
</pallas_src>

<mosaic_0001>
module attributes {stable_mosaic.version = 11 : i64} {
  func.func @_linear_tiled_kernel(%arg0: i32, %arg1: i32, %arg2: i32, %arg3: memref<16x32xf32, #tpu.memory_space<vmem>>, %arg4: memref<32x128xf32, #tpu.memory_space<vmem>>, %arg5: memref<1x128xf32, #tpu.memory_space<vmem>>, %arg6: memref<16x128xf32, #tpu.memory_space<vmem>>, %arg7: memref<16x128xf32, #tpu.memory_space<vmem>>) attributes {dimension_semantics = [#tpu.dimension_semantics<parallel>, #tpu.dimension_semantics<parallel>, #tpu.dimension_semantics<arbitrary>], iteration_bounds = array<i64: 1, 1, 1>, scalar_prefetch = 0 : i64, scratch_operands = 1 : i64, tpu.core_type = #tpu.core_type<tc>, window_params = [{transform_indices = @transform_0, window_bounds = array<i64: 16, 32>}, {transform_indices = @transform_1, window_bounds = array<i64: 32, 128>}, {transform_indices = @transform_2, window_bounds = array<i64: 1, 128>}, {transform_indices = @transform_3, window_bounds = array<i64: 16, 128>}]} {
    %c0_i32 = arith.constant 0 : i32
    %0 = arith.cmpi eq, %arg2, %c0_i32 : i32
    %1 = arith.extui %0 : i1 to i32
    %c0_i32_0 = arith.constant 0 : i32
    %2 = arith.cmpi ne, %1, %c0_i32_0 : i32
    scf.if %2 {
      %cst_10 = arith.constant 0.000000e+00 : f32
      %12 = vector.broadcast %cst_10 : f32 to vector<16x128xf32>
      %c0_11 = arith.constant 0 : index
      %c0_12 = arith.constant 0 : index
      %13 = vector.load %arg7[%c0_11, %c0_12] : memref<16x128xf32, #tpu.memory_space<vmem>>, vector<16x128xf32>
      tpu.vector_store %arg7[%c0_11, %c0_12], %12 {strides = array<i32>} : memref<16x128xf32, #tpu.memory_space<vmem>>, vector<16x128xf32>,
    } else {
    }
    %c0 = arith.constant 0 : index
    %c0_1 = arith.constant 0 : index
    %3 = vector.load %arg7[%c0, %c0_1] : memref<16x128xf32, #tpu.memory_space<vmem>>, vector<16x128xf32>
    %c0_2 = arith.constant 0 : index
    %c0_3 = arith.constant 0 : index
    %4 = vector.load %arg3[%c0_2, %c0_3] : memref<16x32xf32, #tpu.memory_space<vmem>>, vector<16x32xf32>
    %c0_4 = arith.constant 0 : index
    %c0_5 = arith.constant 0 : index
    %5 = vector.load %arg4[%c0_4, %c0_5] : memref<32x128xf32, #tpu.memory_space<vmem>>, vector<32x128xf32>
    %cst = arith.constant dense<0.000000e+00> : vector<16x128xf32>
    %6 = tpu.matmul %4, %5, %cst {dimension_numbers = #tpu.dot_dimension_numbers<[1], [0], [0], [1], [0, 0, 1, 1], [], []>} : vector<16x32xf32>, vector<32x128xf32>, vector<16x128xf32> -> vector<16x128xf32>
    %7 = arith.addf %3, %6 : vector<16x128xf32>
    %c0_6 = arith.constant 0 : index
    %c0_7 = arith.constant 0 : index
    %8 = vector.load %arg7[%c0_6, %c0_7] : memref<16x128xf32, #tpu.memory_space<vmem>>, vector<16x128xf32>
    tpu.vector_store %arg7[%c0_6, %c0_7], %7 {strides = array<i32>} : memref<16x128xf32, #tpu.memory_space<vmem>>, vector<16x128xf32>,
    %c0_i32_8 = arith.constant 0 : i32
    %9 = arith.cmpi eq, %arg2, %c0_i32_8 : i32
    %10 = arith.extui %9 : i1 to i32
    %c0_i32_9 = arith.constant 0 : i32
    %11 = arith.cmpi ne, %10, %c0_i32_9 : i32
    scf.if %11 {
      %c0_10 = arith.constant 0 : index
      %c0_11 = arith.constant 0 : index
      %12 = vector.load %arg7[%c0_10, %c0_11] : memref<16x128xf32, #tpu.memory_space<vmem>>, vector<16x128xf32>
      %c0_12 = arith.constant 0 : index
      %c0_13 = arith.constant 0 : index
      %13 = vector.load %arg5[%c0_12, %c0_13] : memref<1x128xf32, #tpu.memory_space<vmem>>, vector<1x128xf32>
      %14 = vector.broadcast %13 : vector<1x128xf32> to vector<16x128xf32>
      %15 = arith.addf %12, %14 : vector<16x128xf32>
      %c0_14 = arith.constant 0 : index
      %c0_15 = arith.constant 0 : index
      %16 = vector.load %arg6[%c0_14, %c0_15] : memref<16x128xf32, #tpu.memory_space<vmem>>, vector<16x128xf32>
      tpu.vector_store %arg6[%c0_14, %c0_15], %15 {strides = array<i32>} : memref<16x128xf32, #tpu.memory_space<vmem>>, vector<16x128xf32>,
    } else {
    }
    return
  }
  func.func @transform_0(%arg0: i32, %arg1: i32, %arg2: i32) -> (i32, i32) {
    %c0_i32 = arith.constant 0 : i32
    return %arg0, %arg2 : i32, i32
  }
  func.func @transform_1(%arg0: i32, %arg1: i32, %arg2: i32) -> (i32, i32) {
    %c0_i32 = arith.constant 0 : i32
    return %arg2, %arg1 : i32, i32
  }
  func.func @transform_2(%arg0: i32, %arg1: i32, %arg2: i32) -> (i32, i32) {
    %c0_i32 = arith.constant 0 : i32
    %c0_i32_0 = arith.constant 0 : i32
    return %c0_i32, %arg1 : i32, i32
  }
  func.func @transform_3(%arg0: i32, %arg1: i32, %arg2: i32) -> (i32, i32) {
    %c0_i32 = arith.constant 0 : i32
    return %arg0, %arg1 : i32, i32
  }
}

</mosaic_0001>

<llo_original>
// kernel: tpu_custom_call.1
$region0: #{tpu_custom_call.1}
  #allocation0 [shape = 'u32[]', space=smem, size = 0x4, offset = 0x4, fixed_abs, tag = 'smem constant byte address 0x4 - core index']
  #allocation1 [shape = 'u32[144,128]{1,0:T(1,128)}', space=vmem, size = 0x12000, scoped, tag = 'internal scratch']
  #allocation2 [shape = 'f32[16,128]{1,0:T(8,128)}', space=vmem, size = 0x2000, scoped, tag = 'scratch operand']
  %s0 = inlined_call_operand.hbm [shape: f32[16,32], index: 0, kind: input, shape index: {}]
  %s1 = inlined_call_operand.hbm [shape: f32[32,128], index: 1, kind: input, shape index: {}]
  %s2 = inlined_call_operand.vmem [shape: f32[1,128], index: 2, kind: input, shape index: {}]
  %s3 = inlined_call_operand.hbm [shape: f32[16,128], index: 3, kind: output, shape index: {}]
  %s4 = sld [smem:[#allocation0]]
  $region38: #{tpu_custom_call.1} parent=0
    _
  %s6 = ssub.s32 1, %s4
  %s7 = scalar_select 0, %s6, %s4
  $region1: #{tpu_custom_call.1} parent=0
    #allocation3 [shape = 'u8[8192]{0}', space=vmem, size = 0x2000, scoped, tag = 'input window, operand 0, single buffered']
    #allocation4 [shape = 's32[1]{0}', space=sflag, size = 0x4, scoped, tag = 'scoped memory for tpu_custom_call.1']
    #allocation5 [shape = 's32[1]{0}', space=sflag, size = 0x4, scoped, tag = 'scoped memory for tpu_custom_call.1']
    #allocation6 [shape = 'u8[16384]{0}', space=vmem, size = 0x4000, scoped, tag = 'input window, operand 1, single buffered']
    #allocation7 [shape = 's32[1]{0}', space=sflag, size = 0x4, scoped, tag = 'scoped memory for tpu_custom_call.1']
    #allocation8 [shape = 'u8[8192]{0}', space=vmem, size = 0x2000, scoped, tag = 'output window, operand 0, single buffered']
    %8 = vsyncpa [#allocation4], 0
    %9 = vsyncpa [#allocation7], 0
    %10 = vsyncpa [#allocation5], 0
    // Predicated region
    $region2: #{tpu_custom_call.1} parent=1 // pred_check
      _
    $region3: #{tpu_custom_call.1} parent=1 // pred_check_branch
      %12 = sbr.rel (0) target = $region5
    $region4: #{tpu_custom_call.1} parent=1 // pred_region
      %s14 = ssub.s32 256, 256
      %15 = vsyncadd [#allocation4], %s14
      %s16 = sshll.u32 [#allocation3], 4
      %s17 = int_to_ptr.vmem [resolvable:$true] %s16
      %22 = dma.hbm_to_vmem [thread:$0]  %s0, 256, %s17, [#allocation4], 128, 128, 8
    $region5: #{tpu_custom_call.1} parent=1 // pred_fallthru
      _
    // Predicated region
    $region6: #{tpu_custom_call.1} parent=1 // pred_check
      _
    $region7: #{tpu_custom_call.1} parent=1 // pred_check_branch
      %24 = sbr.rel (0) target = $region9
    $region8: #{tpu_custom_call.1} parent=1 // pred_region
      %s26 = ssub.s32 512, 512
      %27 = vsyncadd [#allocation7], %s26
      %s28 = sshll.u32 [#allocation6], 4
      %s29 = int_to_ptr.vmem [resolvable:$true] %s28
      %34 = dma.hbm_to_vmem [thread:$0]  %s1, 512, %s29, [#allocation7], 128, 128, 8
    $region9: #{tpu_custom_call.1} parent=1 // pred_fallthru
      _
    // Predicated region
    $region10: #{tpu_custom_call.1} parent=1 // pred_check
      _
    $region11: #{tpu_custom_call.1} parent=1 // pred_check_branch
      %36 = sbr.rel (0) target = $region13
    $region12: #{tpu_custom_call.1} parent=1 // pred_region
      _
    $region13: #{tpu_custom_call.1} parent=1 // pred_fallthru
      _
    // Predicated region
    $region14: #{tpu_custom_call.1} parent=1 // pred_check
      _
    $region15: #{tpu_custom_call.1} parent=1 // pred_check_branch
      %38 = sbr.rel (0) target = $region17
    $region16: #{tpu_custom_call.1} parent=1 // pred_region
      %39 = dma.done [#allocation4], 256
    $region17: #{tpu_custom_call.1} parent=1 // pred_fallthru
      _
    // Predicated region
    $region18: #{tpu_custom_call.1} parent=1 // pred_check
      _
    $region19: #{tpu_custom_call.1} parent=1 // pred_check_branch
      %41 = sbr.rel (0) target = $region21
    $region20: #{tpu_custom_call.1} parent=1 // pred_region
      %42 = dma.done [#allocation7], 512
    $region21: #{tpu_custom_call.1} parent=1 // pred_fallthru
      _
    %p43 = scmp.eq.s32.totalorder 0, 0
    // Predicated region
    $region22: #{tpu_custom_call.1} parent=1 // pred_check
      %p44 = pneg %p43
    $region23: #{tpu_custom_call.1} parent=1 // pred_check_branch
      %46 = sbr.rel (%p44) target = $region25
    $region24: #{tpu_custom_call.1} parent=1 // pred_region
      %47 = vst [vmem:[#allocation2] sm:$0xff] 0.0
      %48 = vst [vmem:[#allocation2 + $0x8] sm:$0xff] 0.0
    $region25: #{tpu_custom_call.1} parent=1 // pred_fallthru
      _
    %v49 = vld [vmem:[#allocation2] sm:$0xff]
    %v50 = vld [vmem:[#allocation2 + $0x8] sm:$0xff]
    %v51 = vld [vmem:[#allocation3] sm:$0xff]
    %v52 = vld [vmem:[#allocation3 + $0x8] sm:$0xff]
    %v53 = vld [vmem:[#allocation6] sm:$0xff]
    %v54 = vld [vmem:[#allocation6 + $0x8] sm:$0xff]
    %v55 = vld [vmem:[#allocation6 + $0x10] sm:$0xff]
    %v56 = vld [vmem:[#allocation6 + $0x18] sm:$0xff]
    %vm57 = vcmask 261120
    %v59 = vsel %vm57, %v51, 0
    %v62 = vsel %vm57, %v52, 0
    %64 = vmatprep.subr.mxu0 0.0
    %65 = vmatpush1.msra.mxu0 %v53
    %66 = vmatprep.subr.mxu0 0.0
    %67 = vmatpush1.msra.mxu0 %v54
    %68 = vmatprep.subr.mxu0 0.0
    %69 = vmatpush1.msra.mxu0 %v55
    %70 = vmatprep.subr.mxu0 0.0
    %71 = vmatpush1.msra.mxu0 %v56
    %72 = vmatprep.subr.mxu0 0.0
    %73 = vmatpush1.msra.mxu0 0.0
    %74 = vmatprep.subr.mxu0 0.0
    %75 = vmatpush1.msra.mxu0 0.0
    %76 = vmatprep.subr.mxu0 0.0
    %77 = vmatpush1.msra.mxu0 0.0
    %78 = vmatprep.subr.mxu0 0.0
    %79 = vmatpush1.msra.mxu0 0.0
    %80 = vmatprep.subr.mxu0 0.0
    %81 = vmatpush1.msra.mxu0 0.0
    %82 = vmatprep.subr.mxu0 0.0
    %83 = vmatpush1.msra.mxu0 0.0
    %84 = vmatprep.subr.mxu0 0.0
    %85 = vmatpush1.msra.mxu0 0.0
    %86 = vmatprep.subr.mxu0 0.0
    %87 = vmatpush1.msra.mxu0 0.0
    %88 = vmatprep.subr.mxu0 0.0
    %89 = vmatpush1.msra.mxu0 0.0
    %90 = vmatprep.subr.mxu0 0.0
    %91 = vmatpush1.msra.mxu0 0.0
    %92 = vmatprep.subr.mxu0 0.0
    %93 = vmatpush1.msra.mxu0 0.0
    %94 = vmatprep.subr.mxu0 0.0
    %95 = vmatpush1.msra.mxu0 0.0
    %96 = vmatprep.subr.mxu0 0.0
    %97 = vmatpush1.msra.mxu0 0.0
    %98 = vmatprep.subr.mxu0 0.0
    %99 = vmatpush1.msra.mxu0 0.0
    %100 = vmatprep.subr.mxu0 0.0
    %101 = vmatpush1.msra.mxu0 0.0
    %102 = vmatprep.subr.mxu0 0.0
    %103 = vmatpush1.msra.mxu0 0.0
    %104 = vmatprep.subr.mxu0 0.0
    %105 = vmatpush1.msra.mxu0 0.0
    %106 = vmatprep.subr.mxu0 0.0
    %107 = vmatpush1.msra.mxu0 0.0
    %108 = vmatprep.subr.mxu0 0.0
    %109 = vmatpush1.msra.mxu0 0.0
    %110 = vmatprep.subr.mxu0 0.0
    %111 = vmatpush1.msra.mxu0 0.0
    %112 = vmatprep.subr.mxu0 0.0
    %113 = vmatpush1.msra.mxu0 0.0
    %114 = vmatprep.subr.mxu0 0.0
    %115 = vmatpush1.msra.mxu0 0.0
    %116 = vmatprep.subr.mxu0 0.0
    %117 = vmatpush1.msra.mxu0 0.0
    %118 = vmatprep.subr.mxu0 0.0
    %119 = vmatpush1.msra.mxu0 0.0
    %120 = vmatprep.subr.mxu0 0.0
    %121 = vmatpush1.msra.mxu0 0.0
    %122 = vmatprep.subr.mxu0 0.0
    %123 = vmatpush1.msra.mxu0 0.0
    %124 = vmatprep.subr.mxu0 0.0
    %125 = vmatpush1.msra.mxu0 0.0
    %126 = vmatprep.subr.mxu0 0.0
    %127 = vmatpush1.msra.mxu0 0.0
    %128 = vmatprep.mubr.f32.mxu0 0.0
    %129 = vmatmul.mubr.f32.gmra.mrb[0].mxu0 %v59
    %v130 = vpop.f32.mrb[0].mxu0
    %v131 = vadd.f32 0.0, %v130
    %v132 = vpop.f32.mrb[0].mxu0
    %133 = vmatprep.mubr.f32.mxu0 0.0
    %134 = vmatmul.mubr.f32.gmra.mrb[0].mxu0 %v62
    %v135 = vpop.f32.mrb[0].mxu0
    %v136 = vadd.f32 0.0, %v135
    %v137 = vpop.f32.mrb[0].mxu0
    %138 = vdwg.mxu0
    %v139 = vadd.f32 %v49, %v131
    %v140 = vadd.f32 %v50, %v136
    %141 = vst [vmem:[#allocation2] sm:$0xff] %v139
    %142 = vst [vmem:[#allocation2 + $0x8] sm:$0xff] %v140
    // Predicated region
    $region26: #{tpu_custom_call.1} parent=1 // pred_check
      %p143 = pneg %p43
    $region27: #{tpu_custom_call.1} parent=1 // pred_check_branch
      %145 = sbr.rel (%p143) target = $region29
    $region28: #{tpu_custom_call.1} parent=1 // pred_region
      %v146 = vld [vmem:[#allocation2] sm:$0xff]
      %v147 = vld [vmem:[#allocation2 + $0x8] sm:$0xff]
      %v148 = vld [vmem:[%s2] sm:$0x1]
      %v150 = vlaneseq
      %v151 = vshrl.u32 %v150, 7
      %v152 = vsub.s32 0, %v151
      %v153 = vrot.slane %v148, %v152
      %v155 = vadd.f32 %v146, %v153
      %v156 = vadd.f32 %v147, %v153
      %157 = vst [vmem:[#allocation8] sm:$0xff] %v155
      %158 = vst [vmem:[#allocation8 + $0x8] sm:$0xff] %v156
    $region29: #{tpu_custom_call.1} parent=1 // pred_fallthru
      _
    // Predicated region
    $region30: #{tpu_custom_call.1} parent=1 // pred_check
      _
    $region31: #{tpu_custom_call.1} parent=1 // pred_check_branch
      %160 = sbr.rel (0) target = $region33
    $region32: #{tpu_custom_call.1} parent=1 // pred_region
      %s162 = ssub.s32 256, 256
      %163 = vsyncadd [#allocation5], %s162
      %s164 = sshll.u32 [#allocation8], 4
      %s165 = int_to_ptr.vmem [resolvable:$true] %s164
      %170 = dma.vmem_to_hbm [thread:$0]  %s165, 256, %s3, [#allocation5], 128, 128, 8
    $region33: #{tpu_custom_call.1} parent=1 // pred_fallthru
      _
    // Predicated region
    $region34: #{tpu_custom_call.1} parent=1 // pred_check
      _
    $region35: #{tpu_custom_call.1} parent=1 // pred_check_branch
      %172 = sbr.rel (0) target = $region37
    $region36: #{tpu_custom_call.1} parent=1 // pred_region
      %173 = dma.done [#allocation5], 256
    $region37: #{tpu_custom_call.1} parent=1 // pred_fallthru
      _
    %174 = vsyncpa [#allocation4], 1
    %175 = vsyncpa [#allocation7], 1
    %176 = vsyncpa [#allocation5], 1

</llo_original>
